<compile_context>
chip_gen: v7x
topology: tpu7x:2x2x1
jax: 0.10.0
libtpu: 0.0.40
codegen_flags: <defaults>
</compile_context>

<pallas_src>
import jax
import jax.numpy as jnp
from jax import lax
from jax.experimental import pallas as pl
from jax.experimental.pallas import tpu as pltpu


def _round_up(x, m):
    return (x + m - 1) // m * m


def _cdiv(a, b):
    return -(-a // b)


# ---------------------------------------------------------------------------
# Kernels
# ---------------------------------------------------------------------------

def _make_loss_kernel(write_loss):
    """Linear + BCEWithLogits(pos_weight) + merged per-row partial reductions.

    Per batch tile the kernel emits:
      logits           (TB, L)
      loss (optional)  (TB, L)   elementwise, gated to save HBM writeback
      stats            (TB, 3)   [loss row-sum, positive-loss sum, positive count]
    """

    def kernel(x_ref, w_ref, b_ref, lw_ref, y_ref, *out_refs):
        if write_loss:
            logits_ref, loss_ref, stats_ref = out_refs
        else:
            logits_ref, stats_ref = out_refs
            loss_ref = None

        # Cast to bf16 in VMEM (free VPU slot) -> MXU matmul, f32 accumulate.
        x = x_ref[...].astype(jnp.bfloat16)
        w = w_ref[...].astype(jnp.bfloat16)
        logits = jnp.dot(x, w, preferred_element_type=jnp.float32) + b_ref[...]
        logits_ref[...] = logits

        y = y_ref[...]                       # (TB, L) f32 in {0, 1}
        pw = lw_ref[...]                     # (1, L)  BCE pos_weight

        # Numerically stable softplus(-x) = max(-x, 0) + log1p(exp(-|x|))
        sp_neg = jnp.maximum(-logits, 0.0) + jnp.log1p(jnp.exp(-jnp.abs(logits)))
        # BCEWithLogitsLoss(reduction='none', pos_weight=pw):
        #   loss = pw*y*softplus(-x) + (1-y)*(x + softplus(-x))
        loss = pw * y * sp_neg + (1.0 - y) * (logits + sp_neg)
        if write_loss:
            loss_ref[...] = loss

        pos_mask = (y >= 1.0).astype(jnp.float32)
        row_sum = jnp.sum(loss, axis=-1, keepdims=True)              # (TB, 1)
        pos_sum = jnp.sum(loss * pos_mask, axis=-1, keepdims=True)   # (TB, 1)
        pos_cnt = jnp.sum(pos_mask, axis=-1, keepdims=True)          # (TB, 1)

        # Pack the three row stats into one output stream via lane select
        # (pure VPU broadcast + select; no cross-lane movement, single store).
        lane = lax.broadcasted_iota(jnp.int32, stats_ref.shape, 1)
        stats_ref[...] = jnp.where(lane == 0, row_sum,
                                   jnp.where(lane == 1, pos_sum, pos_cnt))

    return kernel


def _infer_kernel(x_ref, w_ref, b_ref, out_ref):
    """Linear + sigmoid (labels=None path)."""
    x = x_ref[...].astype(jnp.bfloat16)
    w = w_ref[...].astype(jnp.bfloat16)
    logits = jnp.dot(x, w, preferred_element_type=jnp.float32) + b_ref[...]
    out_ref[...] = jax.nn.sigmoid(logits)


# ---------------------------------------------------------------------------
# Wrapper (tiling, finalize in plain JAX)
# ---------------------------------------------------------------------------

def _batch_tiling(B, block_b):
    """Adaptive batch tile: big tiles for roofline, bounded padding waste,
    and >= 2 grid steps when the batch is large enough so both v7x
    TensorCores get work on the 'parallel' axis."""
    n_tiles = max(1, _cdiv(B, block_b))
    if n_tiles < 2 and B > 8:
        n_tiles = 2
    tb = _round_up(_cdiv(B, n_tiles), 8)
    b_pad = _round_up(B, tb)
    return tb, b_pad, b_pad // tb


def _vmem_limit(per_step_bytes):
    # Double-buffered pipeline budget + headroom for Mosaic internal scratch;
    # keep comfortably under v7x's 64 MiB physical VMEM.
    return int(min(56 << 20, max(8 << 20, 2 * per_step_bytes + (2 << 20))))


def multilabel_forward(pooled_output, weight_t, bias, label_weight, labels=None,
                       *, block_b=512, return_elementwise_loss=False):
    """Mirrors MultiLabelClassificationBase.forward (dropout = identity).

    pooled_output: (B, H) f32
    weight_t:      (H, L) f32   (torch Linear weight, transposed)
    bias:          (L,)   f32
    label_weight:  (L,)   f32   (BCE pos_weight)
    labels:        (B, L) in {0, 1} or None
    """
    B, H = pooled_output.shape
    L = weight_t.shape[1]
    TB, B_pad, n_bi = _batch_tiling(B, block_b)

    # No dtype pre-pass; batch-pad only when required.
    x = pooled_output
    if B_pad != B:
        x = jnp.pad(x, ((0, B_pad - B), (0, 0)))
    b2 = bias.reshape(1, L).astype(jnp.float32)

    x_spec = pl.BlockSpec((TB, H), lambda i: (i, 0))
    w_spec = pl.BlockSpec((H, L), lambda i: (0, 0))        # resident weight
    vec_spec = pl.BlockSpec((1, L), lambda i: (0, 0))
    bl_spec = pl.BlockSpec((TB, L), lambda i: (i, 0))      # full-extent label dim
    stats_spec = pl.BlockSpec((TB, 3), lambda i: (i, 0))

    # Per-step VMEM footprint with (8, 128) lane/sublane padding, in bytes.
    Lr = _round_up(L, 128)
    Hr = _round_up(H, 128)
    H8 = _round_up(H, 8)

    def _params(per_step_bytes):
        return pltpu.CompilerParams(
            dimension_semantics=("parallel",),
            vmem_limit_bytes=_vmem_limit(per_step_bytes))

    if labels is None:
        per_step = (TB * Hr + H8 * Lr + 8 * Lr + TB * Lr) * 4
        ce = pl.CostEstimate(
            flops=2 * B_pad * H * L,
            transcendentals=B_pad * L,
            bytes_accessed=int(x.nbytes + weight_t.nbytes + b2.nbytes
                               + B_pad * L * 4))
        probs = pl.pallas_call(
            _infer_kernel,
            out_shape=jax.ShapeDtypeStruct((B_pad, L), jnp.float32),
            grid_spec=pltpu.PrefetchScalarGridSpec(
                num_scalar_prefetch=0, grid=(n_bi,),
                in_specs=[x_spec, w_spec, vec_spec],
                out_specs=bl_spec),
            compiler_params=_params(per_step),
            cost_estimate=ce,
        )(x, weight_t, b2)
        return probs if B_pad == B else probs[:B]

    lw2 = label_weight.reshape(1, L).astype(jnp.float32)
    y = labels.astype(jnp.float32)
    if B_pad != B:
        y = jnp.pad(y, ((0, B_pad - B), (0, 0)))

    n_big_out = 2 if return_elementwise_loss else 1
    out_shape = [jax.ShapeDtypeStruct((B_pad, L), jnp.float32)] * n_big_out
    out_shape.append(jax.ShapeDtypeStruct((B_pad, 3), jnp.float32))
    out_specs = tuple([bl_spec] * n_big_out + [stats_spec])

    per_step = (TB * Hr + H8 * Lr + 2 * 8 * Lr
                + (1 + n_big_out) * TB * Lr + TB * 128) * 4
    out_bytes = n_big_out * B_pad * L * 4 + B_pad * 3 * 4
    ce = pl.CostEstimate(
        flops=2 * B_pad * H * L,
        transcendentals=2 * B_pad * L,
        bytes_accessed=int(x.nbytes + weight_t.nbytes + b2.nbytes
                           + lw2.nbytes + y.nbytes + out_bytes))

    outs = pl.pallas_call(
        _make_loss_kernel(return_elementwise_loss),
        out_shape=tuple(out_shape),
        grid_spec=pltpu.PrefetchScalarGridSpec(
            num_scalar_prefetch=0, grid=(n_bi,),
            in_specs=[x_spec, w_spec, vec_spec, vec_spec, bl_spec],
            out_specs=out_specs),
        compiler_params=_params(per_step),
        cost_estimate=ce,
    )(x, weight_t, b2, lw2, y)

    logits = outs[0] if B_pad == B else outs[0][:B]
    loss = None
    if return_elementwise_loss:
        loss = outs[1] if B_pad == B else outs[1][:B]
    stats = outs[-1] if B_pad == B else outs[-1][:B]
    row_sum, pos_sum, pos_cnt = stats[:, 0], stats[:, 1], stats[:, 2]

    row_mean = row_sum / L                               # loss.mean(dim=-1)
    total_sum = jnp.sum(row_sum)
    pos_total = jnp.sum(pos_sum)
    cnt_total = jnp.sum(pos_cnt)
    # masked_select(loss, labels>=1).mean(); NaN on an empty mask, as in torch.
    pos_mean = pos_total / cnt_total
    # Labels assumed exactly {0,1}: negatives derived from totals (one less
    # full reduce).  Soft targets would need a separate negative-mask sum.
    neg_mean = (total_sum - pos_total) / (B * L - cnt_total)

    if return_elementwise_loss:
        return row_mean, pos_mean, neg_mean, logits, loss
    return row_mean, pos_mean, neg_mean, logits


# ---------------------------------------------------------------------------
# Deterministic parameter init + demo
# ---------------------------------------------------------------------------

if __name__ == "__main__":
    drop_prob = 0.1          # unused at inference (dropout = identity)
    batch = 8
    hidden_size = 32
    num_labels = 16

    key = jax.random.PRNGKey(0)
    k_x, k_w, k_b, k_lw, k_y = jax.random.split(key, 5)

    # nn.Linear(hidden_size, num_labels) init: U(-1/sqrt(H), 1/sqrt(H))
    bound = 1.0 / (hidden_size ** 0.5)
    weight = jax.random.uniform(k_w, (num_labels, hidden_size),
                                minval=-bound, maxval=bound, dtype=jnp.float32)
    weight_t = weight.T                                       # (H, L) for kernel
    bias = jax.random.uniform(k_b, (num_labels,),
                              minval=-bound, maxval=bound, dtype=jnp.float32)
    label_weight = jax.random.uniform(k_lw, (num_labels,),
                                      minval=0.5, maxval=2.0, dtype=jnp.float32)
    print(label_weight.shape)  # mirrors print(self.label_weight.shape)

    pooled_output = jax.random.normal(k_x, (batch, hidden_size), dtype=jnp.float32)
    labels = jax.random.bernoulli(k_y, p=0.4,
                                  shape=(batch, num_labels)).astype(jnp.float32)

    # Path with labels; elementwise loss only requested because the module
    # prints the per-element pos/neg losses.
    row_mean, pos_mean, neg_mean, logits, loss = multilabel_forward(
        pooled_output, weight_t, bias, label_weight, labels,
        return_elementwise_loss=True)
    jax.block_until_ready((row_mean, pos_mean, neg_mean, logits, loss))

    # Mirror the module's prints of masked losses (host-side glue)
    print('pos loss: %s' % loss[labels >= 1.0].tolist())
    print('neg loss: %s' % loss[labels <= 0.0].tolist())

    # Optimized path: no (B, L) elementwise-loss HBM writeback.
    row_mean2, pos_mean2, neg_mean2, logits2 = multilabel_forward(
        pooled_output, weight_t, bias, label_weight, labels)
    jax.block_until_ready(row_mean2)

    # Path without labels (sigmoid of logits)
    probs = multilabel_forward(pooled_output, weight_t, bias, label_weight, None)
    jax.block_until_ready(probs)

    # Reference: matmul inputs rounded to bf16 like the kernel, f32 accumulate.
    xb = pooled_output.astype(jnp.bfloat16).astype(jnp.float32)
    wb = weight_t.astype(jnp.bfloat16).astype(jnp.float32)
    ref_logits = xb @ wb + bias[None, :]
    sp = jnp.maximum(-ref_logits, 0.0) + jnp.log1p(jnp.exp(-jnp.abs(ref_logits)))
    ref_loss = label_weight[None, :] * labels * sp + (1.0 - labels) * (ref_logits + sp)
    ref_row_mean = ref_loss.mean(-1)
    ref_pos = ref_loss[labels >= 1.0].mean()
    ref_neg = ref_loss[labels <= 0.0].mean()

    assert jnp.allclose(logits, ref_logits, atol=1e-4)
    assert jnp.allclose(loss, ref_loss, atol=1e-4)
    assert jnp.allclose(row_mean, ref_row_mean, atol=1e-4)
    assert jnp.allclose(pos_mean, ref_pos, atol=1e-4)
    assert jnp.allclose(neg_mean, ref_neg, atol=1e-4)
    assert jnp.allclose(row_mean2, row_mean, atol=1e-6)
    assert jnp.allclose(logits2, logits, atol=1e-6)
    assert jnp.allclose(probs, jax.nn.sigmoid(ref_logits), atol=1e-4)

    print("KERNEL_OK")
</pallas_src>

<mosaic_0001>
module attributes {stable_mosaic.version = 11 : i64} {
  func.func @kernel(%arg0: i32, %arg1: memref<8x32xf32, #tpu.memory_space<vmem>>, %arg2: memref<32x16xf32, #tpu.memory_space<vmem>>, %arg3: memref<1x16xf32, #tpu.memory_space<vmem>>, %arg4: memref<1x16xf32, #tpu.memory_space<vmem>>, %arg5: memref<8x16xf32, #tpu.memory_space<vmem>>, %arg6: memref<8x16xf32, #tpu.memory_space<vmem>>, %arg7: memref<8x16xf32, #tpu.memory_space<vmem>>, %arg8: memref<8x3xf32, #tpu.memory_space<vmem>>) attributes {dimension_semantics = [#tpu.dimension_semantics<parallel>], iteration_bounds = array<i64: 1>, scalar_prefetch = 0 : i64, scratch_operands = 0 : i64, tpu.core_type = #tpu.core_type<tc>, window_params = [{transform_indices = @transform_0, window_bounds = array<i64: 8, 32>}, {pipeline_mode = #tpu.pipeline_mode<synchronous>, transform_indices = @transform_1, window_bounds = array<i64: 32, 16>}, {pipeline_mode = #tpu.pipeline_mode<synchronous>, transform_indices = @transform_2, window_bounds = array<i64: 1, 16>}, {pipeline_mode = #tpu.pipeline_mode<synchronous>, transform_indices = @transform_3, window_bounds = array<i64: 1, 16>}, {transform_indices = @transform_4, window_bounds = array<i64: 8, 16>}, {transform_indices = @transform_5, window_bounds = array<i64: 8, 16>}, {transform_indices = @transform_6, window_bounds = array<i64: 8, 16>}, {transform_indices = @transform_7, window_bounds = array<i64: 8, 3>}]} {
    %c0 = arith.constant 0 : index
    %c0_0 = arith.constant 0 : index
    %0 = vector.load %arg1[%c0, %c0_0] : memref<8x32xf32, #tpu.memory_space<vmem>>, vector<8x32xf32>
    %1 = arith.truncf %0 : vector<8x32xf32> to vector<8x32xbf16>
    %c0_1 = arith.constant 0 : index
    %c0_2 = arith.constant 0 : index
    %2 = vector.load %arg2[%c0_1, %c0_2] : memref<32x16xf32, #tpu.memory_space<vmem>>, vector<32x16xf32>
    %3 = arith.truncf %2 : vector<32x16xf32> to vector<32x16xbf16>
    %cst = arith.constant dense<0.000000e+00> : vector<8x16xf32>
    %4 = tpu.matmul %1, %3, %cst {dimension_numbers = #tpu.dot_dimension_numbers<[1], [0], [0], [1], [0, 0, 1, 1], [], []>} : vector<8x32xbf16>, vector<32x16xbf16>, vector<8x16xf32> -> vector<8x16xf32>
    %c0_3 = arith.constant 0 : index
    %c0_4 = arith.constant 0 : index
    %5 = vector.load %arg3[%c0_3, %c0_4] : memref<1x16xf32, #tpu.memory_space<vmem>>, vector<1x16xf32>
    %6 = vector.broadcast %5 : vector<1x16xf32> to vector<8x16xf32>
    %7 = arith.addf %4, %6 : vector<8x16xf32>
    %c0_5 = arith.constant 0 : index
    %c0_6 = arith.constant 0 : index
    %8 = vector.load %arg6[%c0_5, %c0_6] : memref<8x16xf32, #tpu.memory_space<vmem>>, vector<8x16xf32>
    tpu.vector_store %arg6[%c0_5, %c0_6], %7 {strides = array<i32>} : memref<8x16xf32, #tpu.memory_space<vmem>>, vector<8x16xf32>,
    %c0_7 = arith.constant 0 : index
    %c0_8 = arith.constant 0 : index
    %9 = vector.load %arg5[%c0_7, %c0_8] : memref<8x16xf32, #tpu.memory_space<vmem>>, vector<8x16xf32>
    %c0_9 = arith.constant 0 : index
    %c0_10 = arith.constant 0 : index
    %10 = vector.load %arg4[%c0_9, %c0_10] : memref<1x16xf32, #tpu.memory_space<vmem>>, vector<1x16xf32>
    %cst_11 = arith.constant 0.000000e+00 : f32
    %11 = vector.broadcast %cst_11 : f32 to vector<8x16xf32>
    %12 = arith.subf %11, %7 : vector<8x16xf32>
    %cst_12 = arith.constant 0.000000e+00 : f32
    %13 = vector.broadcast %cst_12 : f32 to vector<8x16xf32>
    %14 = arith.maximumf %12, %13 : vector<8x16xf32>
    %15 = math.absf %7 : vector<8x16xf32>
    %cst_13 = arith.constant 0.000000e+00 : f32
    %16 = vector.broadcast %cst_13 : f32 to vector<8x16xf32>
    %17 = arith.subf %16, %15 : vector<8x16xf32>
    %18 = math.exp %17 : vector<8x16xf32>
    %19 = math.log1p %18 : vector<8x16xf32>
    %20 = arith.addf %14, %19 : vector<8x16xf32>
    %21 = vector.broadcast %10 : vector<1x16xf32> to vector<8x16xf32>
    %22 = arith.mulf %21, %9 : vector<8x16xf32>
    %23 = arith.mulf %22, %20 : vector<8x16xf32>
    %cst_14 = arith.constant 1.000000e+00 : f32
    %24 = vector.broadcast %cst_14 : f32 to vector<8x16xf32>
    %25 = arith.subf %24, %9 : vector<8x16xf32>
    %26 = arith.addf %7, %20 : vector<8x16xf32>
    %27 = arith.mulf %25, %26 : vector<8x16xf32>
    %28 = arith.addf %23, %27 : vector<8x16xf32>
    %c0_15 = arith.constant 0 : index
    %c0_16 = arith.constant 0 : index
    %29 = vector.load %arg7[%c0_15, %c0_16] : memref<8x16xf32, #tpu.memory_space<vmem>>, vector<8x16xf32>
    tpu.vector_store %arg7[%c0_15, %c0_16], %28 {strides = array<i32>} : memref<8x16xf32, #tpu.memory_space<vmem>>, vector<8x16xf32>,
    %cst_17 = arith.constant 1.000000e+00 : f32
    %30 = vector.broadcast %cst_17 : f32 to vector<8x16xf32>
    %31 = arith.cmpf oge, %9, %30 : vector<8x16xf32>
    %32 = arith.extui %31 : vector<8x16xi1> to vector<8x16xi32>
    %33 = arith.sitofp %32 : vector<8x16xi32> to vector<8x16xf32>
    %cst_18 = arith.constant dense<0.000000e+00> : vector<8xf32>
    %34 = vector.multi_reduction <add>, %28, %cst_18 [1] : vector<8x16xf32> to vector<8xf32>
    %35 = vector.shape_cast %34 : vector<8xf32> to vector<8x1xf32>
    %36 = arith.mulf %28, %33 : vector<8x16xf32>
    %cst_19 = arith.constant dense<0.000000e+00> : vector<8xf32>
    %37 = vector.multi_reduction <add>, %36, %cst_19 [1] : vector<8x16xf32> to vector<8xf32>
    %38 = vector.shape_cast %37 : vector<8xf32> to vector<8x1xf32>
    %cst_20 = arith.constant dense<0.000000e+00> : vector<8xf32>
    %39 = vector.multi_reduction <add>, %33, %cst_20 [1] : vector<8x16xf32> to vector<8xf32>
    %40 = vector.shape_cast %39 : vector<8xf32> to vector<8x1xf32>
    %41 = tpu.iota {dimensions = array<i32: 1>} : vector<8x3xi32>
    %c0_i32 = arith.constant 0 : i32
    %42 = vector.broadcast %c0_i32 : i32 to vector<8x3xi32>
    %43 = arith.cmpi eq, %41, %42 : vector<8x3xi32>
    %c1_i32 = arith.constant 1 : i32
    %44 = vector.broadcast %c1_i32 : i32 to vector<8x3xi32>
    %45 = arith.cmpi eq, %41, %44 : vector<8x3xi32>
    %46 = vector.shape_cast %38 : vector<8x1xf32> to vector<8x1xf32>
    %47 = vector.broadcast %46 : vector<8x1xf32> to vector<8x3xf32>
    %48 = vector.shape_cast %40 : vector<8x1xf32> to vector<8x1xf32>
    %49 = vector.broadcast %48 : vector<8x1xf32> to vector<8x3xf32>
    %50 = arith.select %45, %47, %49 : vector<8x3xi1>, vector<8x3xf32>
    %51 = vector.shape_cast %35 : vector<8x1xf32> to vector<8x1xf32>
    %52 = vector.broadcast %51 : vector<8x1xf32> to vector<8x3xf32>
    %53 = arith.select %43, %52, %50 : vector<8x3xi1>, vector<8x3xf32>
    %c0_21 = arith.constant 0 : index
    %c0_22 = arith.constant 0 : index
    %54 = vector.load %arg8[%c0_21, %c0_22] : memref<8x3xf32, #tpu.memory_space<vmem>>, vector<8x3xf32>
    tpu.vector_store %arg8[%c0_21, %c0_22], %53 {strides = array<i32>} : memref<8x3xf32, #tpu.memory_space<vmem>>, vector<8x3xf32>,
    return
  }
  func.func @transform_0(%arg0: i32) -> (i32, i32) {
    %c0_i32 = arith.constant 0 : i32
    %c0_i32_0 = arith.constant 0 : i32
    return %arg0, %c0_i32 : i32, i32
  }
  func.func @transform_1(%arg0: i32) -> (i32, i32) {
    %c0_i32 = arith.constant 0 : i32
    %c0_i32_0 = arith.constant 0 : i32
    %c0_i32_1 = arith.constant 0 : i32
    return %c0_i32, %c0_i32_0 : i32, i32
  }
  func.func @transform_2(%arg0: i32) -> (i32, i32) {
    %c0_i32 = arith.constant 0 : i32
    %c0_i32_0 = arith.constant 0 : i32
    %c0_i32_1 = arith.constant 0 : i32
    return %c0_i32, %c0_i32_0 : i32, i32
  }
  func.func @transform_3(%arg0: i32) -> (i32, i32) {
    %c0_i32 = arith.constant 0 : i32
    %c0_i32_0 = arith.constant 0 : i32
    %c0_i32_1 = arith.constant 0 : i32
    return %c0_i32, %c0_i32_0 : i32, i32
  }
  func.func @transform_4(%arg0: i32) -> (i32, i32) {
    %c0_i32 = arith.constant 0 : i32
    %c0_i32_0 = arith.constant 0 : i32
    return %arg0, %c0_i32 : i32, i32
  }
  func.func @transform_5(%arg0: i32) -> (i32, i32) {
    %c0_i32 = arith.constant 0 : i32
    %c0_i32_0 = arith.constant 0 : i32
    return %arg0, %c0_i32 : i32, i32
  }
  func.func @transform_6(%arg0: i32) -> (i32, i32) {
    %c0_i32 = arith.constant 0 : i32
    %c0_i32_0 = arith.constant 0 : i32
    return %arg0, %c0_i32 : i32, i32
  }
  func.func @transform_7(%arg0: i32) -> (i32, i32) {
    %c0_i32 = arith.constant 0 : i32
    %c0_i32_0 = arith.constant 0 : i32
    return %arg0, %c0_i32 : i32, i32
  }
}

</mosaic_0001>

<llo_original>
// kernel: tpu_custom_call.1
$region0: #{tpu_custom_call.1}
  #allocation0 [shape = 'u32[]', space=smem, size = 0x4, offset = 0x4, fixed_abs, tag = 'smem constant byte address 0x4 - core index']
  #allocation1 [shape = 'u32[144,128]{1,0:T(1,128)}', space=vmem, size = 0x12000, scoped, tag = 'internal scratch']
  %s0 = inlined_call_operand.vmem [shape: f32[8,32], index: 0, kind: input, shape index: {}]
  %s1 = inlined_call_operand.vmem [shape: f32[32,16], index: 1, kind: input, shape index: {}]
  %s2 = inlined_call_operand.vmem [shape: f32[1,16], index: 2, kind: input, shape index: {}]
  %s3 = inlined_call_operand.vmem [shape: f32[1,16], index: 3, kind: input, shape index: {}]
  %s4 = inlined_call_operand.vmem [shape: f32[8,16], index: 4, kind: input, shape index: {}]
  %s5 = inlined_call_operand.hbm [shape: f32[8,16], index: 5, kind: output, shape index: {0}]
  %s6 = inlined_call_operand.hbm [shape: f32[8,16], index: 6, kind: output, shape index: {1}]
  %s7 = inlined_call_operand.vmem [shape: f32[8,3], index: 7, kind: output, shape index: {2}]
  %8 = xla_tuple %s5, %s6, %s7
  %s9 = sld [smem:[#allocation0]]
  $region46: #{tpu_custom_call.1} parent=0
    _
  %s11 = ssub.s32 1, %s9
  %s12 = scalar_select 0, %s11, %s9
  $region1: #{tpu_custom_call.1} parent=0
    #allocation2 [shape = 'u8[4096]{0}', space=vmem, size = 0x1000, scoped, tag = 'output window, operand 0, single buffered']
    #allocation3 [shape = 's32[1]{0}', space=sflag, size = 0x4, scoped, tag = 'scoped memory for tpu_custom_call.1']
    #allocation4 [shape = 'u8[4096]{0}', space=vmem, size = 0x1000, scoped, tag = 'output window, operand 1, single buffered']
    #allocation5 [shape = 's32[1]{0}', space=sflag, size = 0x4, scoped, tag = 'scoped memory for tpu_custom_call.1']
    %13 = vsyncpa [#allocation3], 0
    %14 = vsyncpa [#allocation5], 0
    // Predicated region
    $region2: #{tpu_custom_call.1} parent=1 // pred_check
      _
    $region3: #{tpu_custom_call.1} parent=1 // pred_check_branch
      %16 = sbr.rel (0) target = $region5
    $region4: #{tpu_custom_call.1} parent=1 // pred_region
      _
    $region5: #{tpu_custom_call.1} parent=1 // pred_fallthru
      _
    // Predicated region
    $region6: #{tpu_custom_call.1} parent=1 // pred_check
      _
    $region7: #{tpu_custom_call.1} parent=1 // pred_check_branch
      %18 = sbr.rel (0) target = $region9
    $region8: #{tpu_custom_call.1} parent=1 // pred_region
      _
    $region9: #{tpu_custom_call.1} parent=1 // pred_fallthru
      _
    // Predicated region
    $region10: #{tpu_custom_call.1} parent=1 // pred_check
      _
    $region11: #{tpu_custom_call.1} parent=1 // pred_check_branch
      %20 = sbr.rel (0) target = $region13
    $region12: #{tpu_custom_call.1} parent=1 // pred_region
      _
    $region13: #{tpu_custom_call.1} parent=1 // pred_fallthru
      _
    // Predicated region
    $region14: #{tpu_custom_call.1} parent=1 // pred_check
      _
    $region15: #{tpu_custom_call.1} parent=1 // pred_check_branch
      %22 = sbr.rel (0) target = $region17
    $region16: #{tpu_custom_call.1} parent=1 // pred_region
      _
    $region17: #{tpu_custom_call.1} parent=1 // pred_fallthru
      _
    // Predicated region
    $region18: #{tpu_custom_call.1} parent=1 // pred_check
      _
    $region19: #{tpu_custom_call.1} parent=1 // pred_check_branch
      %24 = sbr.rel (0) target = $region21
    $region20: #{tpu_custom_call.1} parent=1 // pred_region
      _
    $region21: #{tpu_custom_call.1} parent=1 // pred_fallthru
      _
    %v26 = vld [vmem:[%s0] sm:$0xff]
    %v27 = vpack.c.bf16 %v26, %v26
    %v28 = vld [vmem:[%s1] sm:$0xff]
    %v29 = vld [vmem:[%s1 + $0x8] sm:$0xff]
    %v30 = vld [vmem:[%s1 + $0x10] sm:$0xff]
    %v31 = vld [vmem:[%s1 + $0x18] sm:$0xff]
    %v32 = vpack.c.bf16 %v29, %v28
    %v33 = vpack.c.bf16 %v31, %v30
    %v34 = vld [vmem:[%s2] sm:$0x1]
    %v36 = vlaneseq
    %v37 = vshrl.u32 %v36, 7
    %v38 = vsub.s32 0, %v37
    %v39 = vrot.slane %v34, %v38
    %vm41 = vcmask 261120
    %v43 = vsel %vm41, %v27, 0
    %45 = vmatprep.subr.bf16.mxu0 0
    %46 = vmatpush1.bf16.msra.mxu0 %v32
    %47 = vmatprep.subr.bf16.mxu0 0
    %48 = vmatpush1.bf16.msra.mxu0 %v33
    %49 = vmatprep.subr.bf16.mxu0 0
    %50 = vmatpush1.bf16.msra.mxu0 0
    %51 = vmatprep.subr.bf16.mxu0 0
    %52 = vmatpush1.bf16.msra.mxu0 0
    %53 = vmatprep.subr.bf16.mxu0 0
    %54 = vmatpush1.bf16.msra.mxu0 0
    %55 = vmatprep.subr.bf16.mxu0 0
    %56 = vmatpush1.bf16.msra.mxu0 0
    %57 = vmatprep.subr.bf16.mxu0 0
    %58 = vmatpush1.bf16.msra.mxu0 0
    %59 = vmatprep.subr.bf16.mxu0 0
    %60 = vmatpush1.bf16.msra.mxu0 0
    %61 = vmatprep.subr.bf16.mxu0 0
    %62 = vmatpush1.bf16.msra.mxu0 0
    %63 = vmatprep.subr.bf16.mxu0 0
    %64 = vmatpush1.bf16.msra.mxu0 0
    %65 = vmatprep.subr.bf16.mxu0 0
    %66 = vmatpush1.bf16.msra.mxu0 0
    %67 = vmatprep.subr.bf16.mxu0 0
    %68 = vmatpush1.bf16.msra.mxu0 0
    %69 = vmatprep.subr.bf16.mxu0 0
    %70 = vmatpush1.bf16.msra.mxu0 0
    %71 = vmatprep.subr.bf16.mxu0 0
    %72 = vmatpush1.bf16.msra.mxu0 0
    %73 = vmatprep.subr.bf16.mxu0 0
    %74 = vmatpush1.bf16.msra.mxu0 0
    %75 = vmatprep.subr.bf16.mxu0 0
    %76 = vmatpush1.bf16.msra.mxu0 0
    %77 = vmatprep.mubr.bf16.mxu0 0
    %78 = vmatmul.mubr.bf16.gmra.mrb[0].mxu0 %v43
    %v79 = vpop.f32.mrb[0].mxu0
    %v80 = vadd.f32 %v39, %v79
    %v81 = vpop.f32.mrb[0].mxu0
    %v82 = vpop.f32.mrb[0].mxu0
    %v83 = vpop.f32.mrb[0].mxu0
    %84 = vdwg.mxu0
    %vm85 = vcmask 130048
    %86 = vst.msk [vmem:[#allocation2] sm:$0xff] %vm85, %v80
    %v87 = vld [vmem:[%s4] sm:$0xff]
    %v88 = vld [vmem:[%s3] sm:$0x1]
    %v89 = vsub.f32 0.0, %v80
    %v90 = vmax.f32 %v89, 0.0
    %v91 = vand.u32 2147483647, %v80
    %v92 = vsub.f32 0.0, %v91
    %v93 = vmul.f32 %v92, 1.442695
    %v94 = vpow.pop %v93
    %v95 = vadd.f32 %v94, 1.0
    %v96 = vlog2.pop %v95
    %v97 = vmul.f32 %v96, 0.6931472
    %v98 = vmul.f32 -0.5, %v94
    %v99 = vadd.f32 %v98, 1.0
    %v100 = vmul.f32 %v99, %v94
    %v101 = vand.u32 2147483647, %v94
    %vm102 = vcmp.lt.f32.partialorder %v101, 0.0004427343
    %v103 = vsel %vm102, %v100, %v97
    %v104 = vadd.f32 %v90, %v103
    %v106 = vlaneseq
    %v107 = vshrl.u32 %v106, 7
    %v108 = vsub.s32 0, %v107
    %v109 = vrot.slane %v88, %v108
    %v111 = vmul.f32 %v109, %v87
    %v112 = vmul.f32 %v111, %v104
    %v113 = vsub.f32 1.0, %v87
    %v114 = vadd.f32 %v80, %v104
    %v115 = vmul.f32 %v113, %v114
    %v116 = vadd.f32 %v112, %v115
    %117 = vst.msk [vmem:[#allocation4] sm:$0xff] %vm85, %v116
    %vm118 = vcmp.ge.f32.partialorder %v87, 1.0
    %v119 = vsel %vm118, 1, 0
    %v120 = vcvt.s32.f32 %v119
    %v121 = vsel %vm85, %v116, 0.0
    %122 = vadd.xlane.f32.xlu0 %v121
    %v123 = vpop.xlane.xlu0 %122
    %v124 = vmul.f32 %v116, %v120
    %v125 = vsel %vm85, %v124, 0.0
    %126 = vadd.xlane.f32.xlu0 %v125
    %v127 = vpop.xlane.xlu0 %126
    %v128 = vsel %vm85, %v120, 0.0
    %129 = vadd.xlane.f32.xlu0 %v128
    %v130 = vpop.xlane.xlu0 %129
    %v131 = vlaneseq
    %v132 = vand.u32 %v131, 127
    %vm133 = vcmp.eq.s32.totalorder %v132, 0
    %vm134 = vcmp.eq.s32.totalorder %v132, 1
    %v135 = vsel %vm134, %v127, %v130
    %v136 = vsel %vm133, %v123, %v135
    %vm137 = vcmask 23552
    %138 = vst.msk [vmem:[%s7] sm:$0xff] %vm137, %v136
    // Predicated region
    $region22: #{tpu_custom_call.1} parent=1 // pred_check
      _
    $region23: #{tpu_custom_call.1} parent=1 // pred_check_branch
      %140 = sbr.rel (0) target = $region25
    $region24: #{tpu_custom_call.1} parent=1 // pred_region
      %s142 = ssub.s32 128, 128
      %143 = vsyncadd [#allocation3], %s142
      %s145 = sshll.u32 [#allocation2], 4
      %s146 = int_to_ptr.vmem [resolvable:$true] %s145
      %148 = dma.vmem_to_hbm [thread:$0]  %s146, 128, %s5, [#allocation3]
    $region25: #{tpu_custom_call.1} parent=1 // pred_fallthru
      _
    // Predicated region
    $region26: #{tpu_custom_call.1} parent=1 // pred_check
      _
    $region27: #{tpu_custom_call.1} parent=1 // pred_check_branch
      %150 = sbr.rel (0) target = $region29
    $region28: #{tpu_custom_call.1} parent=1 // pred_region
      %s152 = ssub.s32 128, 128
      %153 = vsyncadd [#allocation5], %s152
      %s155 = sshll.u32 [#allocation4], 4
      %s156 = int_to_ptr.vmem [resolvable:$true] %s155
      %158 = dma.vmem_to_hbm [thread:$0]  %s156, 128, %s6, [#allocation5]
    $region29: #{tpu_custom_call.1} parent=1 // pred_fallthru
      _
    // Predicated region
    $region30: #{tpu_custom_call.1} parent=1 // pred_check
      _
    $region31: #{tpu_custom_call.1} parent=1 // pred_check_branch
      %160 = sbr.rel (0) target = $region33
    $region32: #{tpu_custom_call.1} parent=1 // pred_region
      _
    $region33: #{tpu_custom_call.1} parent=1 // pred_fallthru
      _
    // Predicated region
    $region34: #{tpu_custom_call.1} parent=1 // pred_check
      _
    $region35: #{tpu_custom_call.1} parent=1 // pred_check_branch
      %162 = sbr.rel (0) target = $region37
    $region36: #{tpu_custom_call.1} parent=1 // pred_region
      %163 = dma.done [#allocation3], 128
    $region37: #{tpu_custom_call.1} parent=1 // pred_fallthru
      _
    // Predicated region
    $region38: #{tpu_custom_call.1} parent=1 // pred_check
      _
    $region39: #{tpu_custom_call.1} parent=1 // pred_check_branch
      %165 = sbr.rel (0) target = $region41
    $region40: #{tpu_custom_call.1} parent=1 // pred_region
      %166 = dma.done [#allocation5], 128
    $region41: #{tpu_custom_call.1} parent=1 // pred_fallthru
      _
    // Predicated region
    $region42: #{tpu_custom_call.1} parent=1 // pred_check
      _
    $region43: #{tpu_custom_call.1} parent=1 // pred_check_branch
      %168 = sbr.rel (0) target = $region45
    $region44: #{tpu_custom_call.1} parent=1 // pred_region
      _
    $region45: #{tpu_custom_call.1} parent=1 // pred_fallthru
      _
    %169 = vsyncpa [#allocation3], 1
    %170 = vsyncpa [#allocation5], 1

</llo_original>
